<compile_context>
chip_gen: v6e
topology: v6e:2x2x1
jax: 0.10.0
libtpu: 0.0.40
codegen_flags: <defaults>
</compile_context>

<pallas_src>
import jax
import jax.numpy as jnp
from jax.experimental import pallas as pl
from jax.experimental.pallas import tpu as pltpu


_LANE_CANDIDATES = (4096, 2048, 1024, 512, 256, 128)
_TARGET_BLOCK_BYTES = 4 * 1024 * 1024     # ~4 MiB per block (per array)
# in+out x double-buffer x 4 MiB = 16 MiB pipeline; 40 MiB scoped limit leaves
# headroom for internal scratch and fits physical VMEM on v5e/v6e (128 MiB) and
# v7x (64 MiB per TC).
_VMEM_LIMIT_BYTES = 40 * 1024 * 1024


def _round_up(x, m):
    return ((x + m - 1) // m) * m


def _sublane_align(itemsize):
    # Native tile sublane count: 8 for 32-bit, 16 for 16-bit, 32 for 8-bit.
    return max(8, 32 // itemsize)


def _mish_kernel(x_ref, o_ref):
    x = x_ref[...].astype(jnp.float32)
    # mish(x) = x * tanh(ln(1+e^x)) = x * ((1+e^x)^2 - 1) / ((1+e^x)^2 + 1)
    #         = x * m / (m + 2),  m = e^x * (e^x + 2)   (no cancellation).
    # Clamp the exp argument: for x >= 20 the ratio is already 1.0 in f32 so
    # mish(x) == x, and e^2x never overflows. This also makes uninitialized
    # lanes of a partial last block harmless (their stores are masked).
    e = jnp.exp(jnp.minimum(x, 20.0))
    m = e * (e + 2.0)
    # Full-precision reciprocal keeps the divide's refinement off the VALU.
    y = x * (m * pl.reciprocal(m + 2.0, approx=False))
    o_ref[...] = y.astype(o_ref.dtype)


def _compiler_params():
    return pltpu.CompilerParams(
        dimension_semantics=("parallel",),
        vmem_limit_bytes=_VMEM_LIMIT_BYTES,
    )


def _mish_2d(x2d, orig_dtype, cost):
    """Lane-aligned fast path: (rows, lanes) slab, lanes a multiple of 128."""
    rows, lanes = x2d.shape
    itemsize = jnp.dtype(orig_dtype).itemsize
    row_align = _sublane_align(itemsize)
    target_elems = _TARGET_BLOCK_BYTES // itemsize
    max_block_rows = max(row_align, (target_elems // lanes) // row_align * row_align)

    if rows > max_block_rows:
        block_rows = max_block_rows
        nb = pl.cdiv(rows, block_rows)
        if nb % 2 == 1:
            # Prefer an even block count so the two v7x TensorCores balance.
            cand = _round_up(pl.cdiv(rows, nb + 1), row_align)
            if cand >= row_align and pl.cdiv(rows, cand) % 2 == 0:
                block_rows = cand
    elif rows >= 2 * row_align:
        # Small array: still emit 2 blocks so both v7x TensorCores get work.
        block_rows = _round_up(pl.cdiv(rows, 2), row_align)
    else:
        block_rows = rows  # full extent, single block (tiny array)

    grid = (pl.cdiv(rows, block_rows),)
    return pl.pallas_call(
        _mish_kernel,
        out_shape=jax.ShapeDtypeStruct(x2d.shape, orig_dtype),
        grid_spec=pltpu.PrefetchScalarGridSpec(
            num_scalar_prefetch=0,
            grid=grid,
            in_specs=[pl.BlockSpec((block_rows, lanes), lambda i: (i, 0))],
            out_specs=pl.BlockSpec((block_rows, lanes), lambda i: (i, 0)),
        ),
        compiler_params=_compiler_params(),
        cost_estimate=cost,
    )(x2d)


def _mish_1d(flat, orig_dtype, cost):
    """Ragged path: flat 1D array, partial last block masked by Pallas.

    No jnp.pad / slice round-trips -> no extra HBM traffic for ragged sizes.
    """
    (n,) = flat.shape
    itemsize = jnp.dtype(orig_dtype).itemsize
    elem_align = 128 * _sublane_align(itemsize)  # one full native tile
    target_elems = max(
        elem_align,
        (_TARGET_BLOCK_BYTES // itemsize) // elem_align * elem_align,
    )

    if n > target_elems:
        block = target_elems
    elif n >= 2 * elem_align:
        block = _round_up(pl.cdiv(n, 2), elem_align)  # >= 2 blocks for dual-TC
    else:
        block = n  # full extent, single block (small ragged array)

    grid = (pl.cdiv(n, block),)
    return pl.pallas_call(
        _mish_kernel,
        out_shape=jax.ShapeDtypeStruct(flat.shape, orig_dtype),
        grid_spec=pltpu.PrefetchScalarGridSpec(
            num_scalar_prefetch=0,
            grid=grid,
            in_specs=[pl.BlockSpec((block,), lambda i: (i,))],
            out_specs=pl.BlockSpec((block,), lambda i: (i,)),
        ),
        compiler_params=_compiler_params(),
        cost_estimate=cost,
    )(flat)


def mish_pallas(x: jax.Array) -> jax.Array:
    orig_shape = x.shape
    orig_dtype = x.dtype
    n = x.size
    if n == 0:
        return x
    itemsize = jnp.dtype(orig_dtype).itemsize

    cost = pl.CostEstimate(
        flops=7 * n,
        transcendentals=2 * n,
        bytes_accessed=2 * n * itemsize,
    )

    # Fast path: widest lane width that evenly divides the element count
    # (free reshape, no pad / slice HBM passes).
    lanes = None
    for w in _LANE_CANDIDATES:
        if n % w == 0:
            lanes = w
            break

    if lanes is not None:
        out = _mish_2d(x.reshape(n // lanes, lanes), orig_dtype, cost)
    else:
        out = _mish_1d(x.reshape(-1), orig_dtype, cost)

    return out.reshape(orig_shape)


def mish_ref(x):
    return x * jnp.tanh(jax.nn.softplus(x))


if __name__ == "__main__":
    key = jax.random.PRNGKey(0)

    # Main case (module spec: (N, *) input) — hits the no-pad 2D fast path.
    x = jax.random.normal(key, (2, 4, 16, 16), dtype=jnp.float32)
    y = mish_pallas(x)
    jax.block_until_ready(y)
    y_ref = mish_ref(x)
    assert y.shape == x.shape and y.dtype == x.dtype
    assert jnp.allclose(y, y_ref, atol=1e-5, rtol=1e-5)

    # Ragged-size case — exercises the flat 1D path (no pad, no slice).
    x2 = jax.random.normal(jax.random.PRNGKey(1), (3, 5, 7), dtype=jnp.float32) * 8.0
    y2 = mish_pallas(x2)
    jax.block_until_ready(y2)
    assert y2.shape == x2.shape and y2.dtype == x2.dtype
    assert jnp.allclose(y2, mish_ref(x2), atol=1e-5, rtol=1e-5)

    # bf16 case — exercises the dtype-aware block sizing.
    x3 = jax.random.normal(jax.random.PRNGKey(2), (2, 8, 16, 32), dtype=jnp.bfloat16)
    y3 = mish_pallas(x3)
    jax.block_until_ready(y3)
    y3_ref = mish_ref(x3.astype(jnp.float32))
    assert y3.shape == x3.shape and y3.dtype == x3.dtype
    assert jnp.allclose(y3.astype(jnp.float32), y3_ref, atol=1e-2, rtol=1e-2)

    print("KERNEL_OK")
</pallas_src>

<mosaic_0001>
module attributes {stable_mosaic.version = 11 : i64} {
  func.func @_mish_kernel(%arg0: i32, %arg1: memref<1x2048xf32, #tpu.memory_space<vmem>>, %arg2: memref<1x2048xf32, #tpu.memory_space<vmem>>) attributes {dimension_semantics = [#tpu.dimension_semantics<parallel>], iteration_bounds = array<i64: 1>, scalar_prefetch = 0 : i64, scratch_operands = 0 : i64, tpu.core_type = #tpu.core_type<tc>, window_params = [{transform_indices = @transform_0, window_bounds = array<i64: 1, 2048>}, {transform_indices = @transform_1, window_bounds = array<i64: 1, 2048>}]} {
    %c0 = arith.constant 0 : index
    %c0_0 = arith.constant 0 : index
    %0 = vector.load %arg1[%c0, %c0_0] : memref<1x2048xf32, #tpu.memory_space<vmem>>, vector<1x2048xf32>
    %cst = arith.constant 2.000000e+01 : f32
    %1 = vector.broadcast %cst : f32 to vector<1x2048xf32>
    %2 = arith.minimumf %0, %1 : vector<1x2048xf32>
    %3 = math.exp %2 : vector<1x2048xf32>
    %cst_1 = arith.constant 2.000000e+00 : f32
    %4 = vector.broadcast %cst_1 : f32 to vector<1x2048xf32>
    %5 = arith.addf %3, %4 : vector<1x2048xf32>
    %6 = arith.mulf %3, %5 : vector<1x2048xf32>
    %cst_2 = arith.constant 2.000000e+00 : f32
    %7 = vector.broadcast %cst_2 : f32 to vector<1x2048xf32>
    %8 = arith.addf %6, %7 : vector<1x2048xf32>
    %9 = tpu.reciprocal %8 : vector<1x2048xf32> -> vector<1x2048xf32>
    %10 = arith.mulf %6, %9 : vector<1x2048xf32>
    %11 = arith.mulf %0, %10 : vector<1x2048xf32>
    %c0_3 = arith.constant 0 : index
    %c0_4 = arith.constant 0 : index
    %12 = vector.load %arg2[%c0_3, %c0_4] : memref<1x2048xf32, #tpu.memory_space<vmem>>, vector<1x2048xf32>
    tpu.vector_store %arg2[%c0_3, %c0_4], %11 {strides = array<i32>} : memref<1x2048xf32, #tpu.memory_space<vmem>>, vector<1x2048xf32>,
    return
  }
  func.func @transform_0(%arg0: i32) -> (i32, i32) {
    %c0_i32 = arith.constant 0 : i32
    %c0_i32_0 = arith.constant 0 : i32
    return %arg0, %c0_i32 : i32, i32
  }
  func.func @transform_1(%arg0: i32) -> (i32, i32) {
    %c0_i32 = arith.constant 0 : i32
    %c0_i32_0 = arith.constant 0 : i32
    return %arg0, %c0_i32 : i32, i32
  }
}

</mosaic_0001>

<llo_original>
// kernel: tpu_custom_call.1
$region0: #{tpu_custom_call.1}
  #allocation0 [shape = 'u32[]', space=smem, size = 0x4, offset = 0x4, fixed_abs, tag = 'smem constant byte address 0x4 - core index']
  #allocation1 [shape = 'u32[144,128]{1,0:T(1,128)}', space=vmem, size = 0x12000, scoped, tag = 'internal scratch']
  %s0 = inlined_call_operand.hbm [shape: f32[1,2048], index: 0, kind: input, shape index: {}]
  %s1 = inlined_call_operand.hbm [shape: f32[1,2048], index: 1, kind: output, shape index: {}]
  %s2 = sld [smem:[#allocation0]]
  $region18: #{tpu_custom_call.1} parent=0
    _
  %s4 = ssub.s32 1, %s2
  %s5 = scalar_select 0, %s4, %s2
  $region1: #{tpu_custom_call.1} parent=0
    #allocation2 [shape = 'u8[8192]{0}', space=vmem, size = 0x2000, scoped, tag = 'input window, operand 0, single buffered']
    #allocation3 [shape = 's32[1]{0}', space=sflag, size = 0x4, scoped, tag = 'scoped memory for tpu_custom_call.1']
    #allocation4 [shape = 's32[1]{0}', space=sflag, size = 0x4, scoped, tag = 'scoped memory for tpu_custom_call.1']
    #allocation5 [shape = 'u8[8192]{0}', space=vmem, size = 0x2000, scoped, tag = 'output window, operand 0, single buffered']
    %6 = vsyncpa [#allocation3], 0
    %7 = vsyncpa [#allocation4], 0
    // Predicated region
    $region2: #{tpu_custom_call.1} parent=1 // pred_check
      _
    $region3: #{tpu_custom_call.1} parent=1 // pred_check_branch
      %9 = sbr.rel (0) target = $region5
    $region4: #{tpu_custom_call.1} parent=1 // pred_region
      %s11 = ssub.s32 256, 256
      %12 = vsyncadd [#allocation3], %s11
      %s14 = sshll.u32 [#allocation2], 4
      %s15 = int_to_ptr.vmem [resolvable:$true] %s14
      %17 = dma.hbm_to_vmem [thread:$0]  %s0, 256, %s15, [#allocation3]
    $region5: #{tpu_custom_call.1} parent=1 // pred_fallthru
      _
    // Predicated region
    $region6: #{tpu_custom_call.1} parent=1 // pred_check
      _
    $region7: #{tpu_custom_call.1} parent=1 // pred_check_branch
      %19 = sbr.rel (0) target = $region9
    $region8: #{tpu_custom_call.1} parent=1 // pred_region
      %20 = dma.done [#allocation3], 256
    $region9: #{tpu_custom_call.1} parent=1 // pred_fallthru
      _
    %v21 = vld [vmem:[#allocation2] sm:$0xff]
    %v22 = vld [vmem:[#allocation2 + $0x8] sm:$0xff]
    %v23 = vmin.f32 %v21, 20.0
    %v24 = vmin.f32 %v22, 20.0
    %v25 = vmul.f32 %v23, 1.442695
    %v26 = vpow.pop %v25
    %v27 = vmul.f32 %v24, 1.442695
    %v28 = vpow.pop %v27
    %v29 = vadd.f32 %v26, 2.0
    %v30 = vadd.f32 %v28, 2.0
    %v31 = vmul.f32 %v26, %v29
    %v32 = vmul.f32 %v28, %v30
    %v33 = vadd.f32 %v31, 2.0
    %v34 = vadd.f32 %v32, 2.0
    %v35 = vrcp.pop %v33
    %v36 = vrcp.pop %v34
    %v37 = vmul.f32 %v31, %v35
    %v38 = vmul.f32 %v32, %v36
    %v39 = vmul.f32 %v21, %v37
    %v40 = vmul.f32 %v22, %v38
    %41 = vst [vmem:[#allocation5] sm:$0xff] %v39
    %42 = vst [vmem:[#allocation5 + $0x8] sm:$0xff] %v40
    // Predicated region
    $region10: #{tpu_custom_call.1} parent=1 // pred_check
      _
    $region11: #{tpu_custom_call.1} parent=1 // pred_check_branch
      %44 = sbr.rel (0) target = $region13
    $region12: #{tpu_custom_call.1} parent=1 // pred_region
      %s46 = ssub.s32 256, 256
      %47 = vsyncadd [#allocation4], %s46
      %s49 = sshll.u32 [#allocation5], 4
      %s50 = int_to_ptr.vmem [resolvable:$true] %s49
      %52 = dma.vmem_to_hbm [thread:$0]  %s50, 256, %s1, [#allocation4]
    $region13: #{tpu_custom_call.1} parent=1 // pred_fallthru
      _
    // Predicated region
    $region14: #{tpu_custom_call.1} parent=1 // pred_check
      _
    $region15: #{tpu_custom_call.1} parent=1 // pred_check_branch
      %54 = sbr.rel (0) target = $region17
    $region16: #{tpu_custom_call.1} parent=1 // pred_region
      %55 = dma.done [#allocation4], 256
    $region17: #{tpu_custom_call.1} parent=1 // pred_fallthru
      _
    %56 = vsyncpa [#allocation3], 1
    %57 = vsyncpa [#allocation4], 1

</llo_original>
